<compile_context>
chip_gen: v7x
topology: tpu7x:2x2x1
jax: 0.10.0
libtpu: 0.0.40
codegen_flags: <defaults>
</compile_context>

<pallas_src>
import math
from functools import partial

import jax
import jax.numpy as jnp
from jax import lax
from jax.experimental import pallas as pl
from jax.experimental.pallas import tpu as pltpu


def _kv_attention_kernel(bblk, t_len,
                         enc_ref,           # (Bblk*T, E)  VMEM
                         dec_ref,           # (Bblk, D)    VMEM
                         len_ref,           # (Bblk, 1)    int32 VMEM
                         wk_ref, bk_ref,    # (E, A), (1, A)
                         wq_ref, bq_ref,    # (D, A), (1, A)  -- pre-scaled by 1/sqrt(A)
                         wv_ref, bv_ref,    # (E, O), (1, O)
                         ctx_ref,           # (Bblk, O)
                         attw_ref):         # (Bblk, T)
    enc = enc_ref[...]                      # (Bblk*T, E)
    dec = dec_ref[...]                      # (Bblk, D)

    # Fused projections: one MXU matmul per weight for the whole batch block.
    keys2d = jnp.dot(enc, wk_ref[...], preferred_element_type=jnp.float32) + bk_ref[...]   # (Bblk*T, A)
    vals2d = jnp.dot(enc, wv_ref[...], preferred_element_type=jnp.float32) + bv_ref[...]   # (Bblk*T, O)
    query = jnp.dot(dec, wq_ref[...], preferred_element_type=jnp.float32) + bq_ref[...]    # (Bblk, A)

    a_dim = keys2d.shape[-1]
    o_dim = vals2d.shape[-1]
    keys = keys2d.reshape(bblk, t_len, a_dim)     # (Bblk, T, A)
    vals = vals2d.reshape(bblk, t_len, o_dim)     # (Bblk, T, O)

    # scores[b, t] = <keys[b, t, :], query[b, :]>  (VPU multiply + XLU lane reduce).
    # Query was pre-scaled by 1/sqrt(attn_dim) in the wrapper.
    scores = jnp.sum(keys * query[:, None, :], axis=-1)                                    # (Bblk, T)

    # Length mask: positions >= enc_len[b] get -inf (masked_fill semantics).
    t_idx = lax.broadcasted_iota(jnp.int32, scores.shape, 1)
    valid = t_idx < len_ref[...]                  # (Bblk, 1) broadcasts against (Bblk, T)
    scores = jnp.where(valid, scores, -jnp.inf)

    # Softmax over the time axis.
    m = jnp.max(scores, axis=-1, keepdims=True)
    e = jnp.exp(scores - m)
    s = jnp.sum(e, axis=-1, keepdims=True)
    p = e * pl.reciprocal(s, approx=False)        # EUP reciprocal (exact)            (Bblk, T)

    # context[b, :] = sum_t p[b, t] * values[b, t, :]  (VPU multiply + sublane reduce).
    ctx = jnp.sum(p[:, :, None] * vals, axis=1)   # (Bblk, O)

    ctx_ref[...] = ctx.astype(ctx_ref.dtype)
    attw_ref[...] = p.astype(attw_ref.dtype)


def _choose_bblk(batch, t_len):
    """Batch-block size: target ~256 projection rows per grid step (v6e/v7x MXU);
    for multi-block grids keep Bblk a multiple of 8 so 2-D blocks stay sublane-aligned."""
    target = max(1, 256 // max(t_len, 1))
    if batch <= target:
        return batch                 # single grid step, block == full batch
    return max(8, (target // 8) * 8)


def key_value_attention(enc_states, enc_len, dec_states, params):
    """Pallas forward pass. Returns (out [B, O], normalized_scores [B, 1, T])."""
    B, T, E = enc_states.shape
    D = dec_states.shape[-1]
    wk_t, bk = params["key"]      # (E, A), (A,)
    wq_t, bq = params["query"]    # (D, A), (A,)
    wv_t, bv = params["value"]    # (E, O), (O,)
    A = wk_t.shape[1]
    O = wv_t.shape[1]

    bblk = _choose_bblk(B, T)
    n_blocks = pl.cdiv(B, bblk)
    b_pad = n_blocks * bblk

    # Pad the batch to a multiple of Bblk. Padded rows get enc_len = T so the
    # softmax never sees an all -inf row; their outputs are sliced off below.
    enc_p = jnp.pad(enc_states, ((0, b_pad - B), (0, 0), (0, 0)))
    dec_p = jnp.pad(dec_states, ((0, b_pad - B), (0, 0)))
    len_p = jnp.pad(enc_len.astype(jnp.int32), (0, b_pad - B), constant_values=T)

    enc2d = enc_p.reshape(b_pad * T, E)          # contiguous slab per batch block
    len2d = len_p.reshape(b_pad, 1)

    # Fold the 1/sqrt(attn_dim) score scaling into the query projection.
    inv_scale = 1.0 / math.sqrt(float(A))
    wq_s = wq_t * inv_scale
    bq_s = (bq * inv_scale).reshape(1, A)
    bk2 = bk.reshape(1, A)
    bv2 = bv.reshape(1, O)

    kernel = partial(_kv_attention_kernel, bblk, T)

    ctx, attw = pl.pallas_call(
        kernel,
        grid=(n_blocks,),
        in_specs=[
            pl.BlockSpec((bblk * T, E), lambda b: (b, 0)),   # enc (flattened batch*time)
            pl.BlockSpec((bblk, D), lambda b: (b, 0)),       # dec
            pl.BlockSpec((bblk, 1), lambda b: (b, 0)),       # enc_len
            pl.BlockSpec((E, A), lambda b: (0, 0)),          # Wk^T   (constant -> no re-DMA)
            pl.BlockSpec((1, A), lambda b: (0, 0)),          # bk
            pl.BlockSpec((D, A), lambda b: (0, 0)),          # Wq^T (pre-scaled)
            pl.BlockSpec((1, A), lambda b: (0, 0)),          # bq (pre-scaled)
            pl.BlockSpec((E, O), lambda b: (0, 0)),          # Wv^T
            pl.BlockSpec((1, O), lambda b: (0, 0)),          # bv
        ],
        out_specs=[
            pl.BlockSpec((bblk, O), lambda b: (b, 0)),       # context slab
            pl.BlockSpec((bblk, T), lambda b: (b, 0)),       # attention-weight slab
        ],
        out_shape=(jax.ShapeDtypeStruct((b_pad, O), jnp.float32),
                   jax.ShapeDtypeStruct((b_pad, T), jnp.float32)),
        compiler_params=pltpu.CompilerParams(
            dimension_semantics=("parallel",)),
    )(enc2d, dec_p, len2d, wk_t, bk2, wq_s, bq_s, wv_t, bv2)

    out = ctx[:B]                            # (B, O)
    attw3 = attw[:B][:, None, :]             # (B, 1, T) -- matches torch transpose(1, 2)
    return out, attw3


def _init_linear(key, in_dim, out_dim):
    """Deterministic nn.Linear-style init. Returns W^T (in, out) and bias (out,)."""
    kw, kb = jax.random.split(key)
    bound = 1.0 / math.sqrt(in_dim)
    w_t = jax.random.uniform(kw, (in_dim, out_dim), jnp.float32, -bound, bound)
    b = jax.random.uniform(kb, (out_dim,), jnp.float32, -bound, bound)
    return w_t, b


def _reference_forward(enc_states, enc_len, dec_states, params):
    """Pure-JAX reference mirroring the PyTorch module."""
    wk_t, bk = params["key"]
    wq_t, bq = params["query"]
    wv_t, bv = params["value"]
    A = wk_t.shape[1]
    T = enc_states.shape[1]

    keys = enc_states @ wk_t + bk                       # (B, T, A)
    values = enc_states @ wv_t + bv                     # (B, T, O)
    query = dec_states @ wq_t + bq                      # (B, A)
    scores = jnp.einsum("bta,ba->bt", keys, query) / jnp.sqrt(jnp.float32(A))
    mask = jnp.arange(T)[None, :] < enc_len.astype(jnp.int32)[:, None]
    scores = jnp.where(mask, scores, -jnp.inf)
    p = jax.nn.softmax(scores, axis=-1)                 # (B, T)
    out = jnp.einsum("bt,bto->bo", p, values)           # (B, O)
    return out, p[:, None, :]                           # (B, O), (B, 1, T)


if __name__ == "__main__":
    # Small shapes consistent with the module's forward.
    B, T = 2, 16
    enc_dim, dec_dim, attn_dim, output_dim = 32, 24, 32, 8

    root = jax.random.PRNGKey(0)
    k_enc, k_dec, k_key, k_query, k_value = jax.random.split(root, 5)

    enc_states = jax.random.normal(k_enc, (B, T, enc_dim), jnp.float32)
    dec_states = jax.random.normal(k_dec, (B, dec_dim), jnp.float32)
    enc_len = jnp.array([T, 11], dtype=jnp.int32)       # real (unpadded) lengths

    params = {
        "key": _init_linear(k_key, enc_dim, attn_dim),
        "query": _init_linear(k_query, dec_dim, attn_dim),
        "value": _init_linear(k_value, enc_dim, output_dim),
    }

    out, attw = key_value_attention(enc_states, enc_len, dec_states, params)
    out = jax.block_until_ready(out)
    attw = jax.block_until_ready(attw)

    ref_out, ref_attw = _reference_forward(enc_states, enc_len, dec_states, params)

    assert out.shape == (B, output_dim)
    assert attw.shape == (B, 1, T)
    assert jnp.allclose(out, ref_out, atol=1e-5, rtol=1e-5)
    assert jnp.allclose(attw, ref_attw, atol=1e-5, rtol=1e-5)

    print("KERNEL_OK")
</pallas_src>

<mosaic_0001>
module attributes {stable_mosaic.version = 11 : i64} {
  func.func @_kv_attention_kernel(%arg0: i32, %arg1: memref<32x32xf32, #tpu.memory_space<vmem>>, %arg2: memref<2x24xf32, #tpu.memory_space<vmem>>, %arg3: memref<2x1xi32, #tpu.memory_space<vmem>>, %arg4: memref<32x32xf32, #tpu.memory_space<vmem>>, %arg5: memref<1x32xf32, #tpu.memory_space<vmem>>, %arg6: memref<24x32xf32, #tpu.memory_space<vmem>>, %arg7: memref<1x32xf32, #tpu.memory_space<vmem>>, %arg8: memref<32x8xf32, #tpu.memory_space<vmem>>, %arg9: memref<1x8xf32, #tpu.memory_space<vmem>>, %arg10: memref<2x8xf32, #tpu.memory_space<vmem>>, %arg11: memref<2x16xf32, #tpu.memory_space<vmem>>) attributes {dimension_semantics = [#tpu.dimension_semantics<parallel>], iteration_bounds = array<i64: 1>, scalar_prefetch = 0 : i64, scratch_operands = 0 : i64, tpu.core_type = #tpu.core_type<tc>, window_params = [{transform_indices = @transform_0, window_bounds = array<i64: 32, 32>}, {transform_indices = @transform_1, window_bounds = array<i64: 2, 24>}, {transform_indices = @transform_2, window_bounds = array<i64: 2, 1>}, {pipeline_mode = #tpu.pipeline_mode<synchronous>, transform_indices = @transform_3, window_bounds = array<i64: 32, 32>}, {pipeline_mode = #tpu.pipeline_mode<synchronous>, transform_indices = @transform_4, window_bounds = array<i64: 1, 32>}, {pipeline_mode = #tpu.pipeline_mode<synchronous>, transform_indices = @transform_5, window_bounds = array<i64: 24, 32>}, {pipeline_mode = #tpu.pipeline_mode<synchronous>, transform_indices = @transform_6, window_bounds = array<i64: 1, 32>}, {pipeline_mode = #tpu.pipeline_mode<synchronous>, transform_indices = @transform_7, window_bounds = array<i64: 32, 8>}, {pipeline_mode = #tpu.pipeline_mode<synchronous>, transform_indices = @transform_8, window_bounds = array<i64: 1, 8>}, {transform_indices = @transform_9, window_bounds = array<i64: 2, 8>}, {transform_indices = @transform_10, window_bounds = array<i64: 2, 16>}]} {
    %c0 = arith.constant 0 : index
    %c0_0 = arith.constant 0 : index
    %0 = vector.load %arg1[%c0, %c0_0] : memref<32x32xf32, #tpu.memory_space<vmem>>, vector<32x32xf32>
    %c0_1 = arith.constant 0 : index
    %c0_2 = arith.constant 0 : index
    %1 = vector.load %arg2[%c0_1, %c0_2] : memref<2x24xf32, #tpu.memory_space<vmem>>, vector<2x24xf32>
    %c0_3 = arith.constant 0 : index
    %c0_4 = arith.constant 0 : index
    %2 = vector.load %arg4[%c0_3, %c0_4] : memref<32x32xf32, #tpu.memory_space<vmem>>, vector<32x32xf32>
    %cst = arith.constant dense<0.000000e+00> : vector<32x32xf32>
    %3 = tpu.matmul %0, %2, %cst {dimension_numbers = #tpu.dot_dimension_numbers<[1], [0], [0], [1], [0, 0, 1, 1], [], []>} : vector<32x32xf32>, vector<32x32xf32>, vector<32x32xf32> -> vector<32x32xf32>
    %c0_5 = arith.constant 0 : index
    %c0_6 = arith.constant 0 : index
    %4 = vector.load %arg5[%c0_5, %c0_6] : memref<1x32xf32, #tpu.memory_space<vmem>>, vector<1x32xf32>
    %5 = vector.broadcast %4 : vector<1x32xf32> to vector<32x32xf32>
    %6 = arith.addf %3, %5 : vector<32x32xf32>
    %c0_7 = arith.constant 0 : index
    %c0_8 = arith.constant 0 : index
    %7 = vector.load %arg8[%c0_7, %c0_8] : memref<32x8xf32, #tpu.memory_space<vmem>>, vector<32x8xf32>
    %cst_9 = arith.constant dense<0.000000e+00> : vector<32x8xf32>
    %8 = tpu.matmul %0, %7, %cst_9 {dimension_numbers = #tpu.dot_dimension_numbers<[1], [0], [0], [1], [0, 0, 1, 1], [], []>} : vector<32x32xf32>, vector<32x8xf32>, vector<32x8xf32> -> vector<32x8xf32>
    %c0_10 = arith.constant 0 : index
    %c0_11 = arith.constant 0 : index
    %9 = vector.load %arg9[%c0_10, %c0_11] : memref<1x8xf32, #tpu.memory_space<vmem>>, vector<1x8xf32>
    %10 = vector.broadcast %9 : vector<1x8xf32> to vector<32x8xf32>
    %11 = arith.addf %8, %10 : vector<32x8xf32>
    %c0_12 = arith.constant 0 : index
    %c0_13 = arith.constant 0 : index
    %12 = vector.load %arg6[%c0_12, %c0_13] : memref<24x32xf32, #tpu.memory_space<vmem>>, vector<24x32xf32>
    %cst_14 = arith.constant dense<0.000000e+00> : vector<2x32xf32>
    %13 = tpu.matmul %1, %12, %cst_14 {dimension_numbers = #tpu.dot_dimension_numbers<[1], [0], [0], [1], [0, 0, 1, 1], [], []>} : vector<2x24xf32>, vector<24x32xf32>, vector<2x32xf32> -> vector<2x32xf32>
    %c0_15 = arith.constant 0 : index
    %c0_16 = arith.constant 0 : index
    %14 = vector.load %arg7[%c0_15, %c0_16] : memref<1x32xf32, #tpu.memory_space<vmem>>, vector<1x32xf32>
    %15 = vector.broadcast %14 : vector<1x32xf32> to vector<2x32xf32>
    %16 = arith.addf %13, %15 : vector<2x32xf32>
    %17 = vector.shape_cast %6 : vector<32x32xf32> to vector<2x16x32xf32>
    %18 = vector.shape_cast %11 : vector<32x8xf32> to vector<2x16x8xf32>
    %19 = vector.shape_cast %16 : vector<2x32xf32> to vector<2x1x32xf32>
    %20 = vector.broadcast %19 : vector<2x1x32xf32> to vector<2x16x32xf32>
    %21 = arith.mulf %17, %20 : vector<2x16x32xf32>
    %cst_17 = arith.constant dense<0.000000e+00> : vector<2x16xf32>
    %22 = vector.multi_reduction <add>, %21, %cst_17 [2] : vector<2x16x32xf32> to vector<2x16xf32>
    %23 = tpu.iota {dimensions = array<i32: 1>} : vector<2x16xi32>
    %c0_18 = arith.constant 0 : index
    %c0_19 = arith.constant 0 : index
    %24 = vector.load %arg3[%c0_18, %c0_19] : memref<2x1xi32, #tpu.memory_space<vmem>>, vector<2x1xi32>
    %25 = vector.broadcast %24 : vector<2x1xi32> to vector<2x16xi32>
    %26 = arith.cmpi slt, %23, %25 : vector<2x16xi32>
    %cst_20 = arith.constant 0xFF800000 : f32
    %27 = vector.broadcast %cst_20 : f32 to vector<2x16xf32>
    %28 = arith.select %26, %22, %27 : vector<2x16xi1>, vector<2x16xf32>
    %cst_21 = arith.constant dense<0xFF800000> : vector<2xf32>
    %29 = vector.multi_reduction <maximumf>, %28, %cst_21 [1] : vector<2x16xf32> to vector<2xf32>
    %30 = vector.shape_cast %29 : vector<2xf32> to vector<2x1xf32>
    %31 = vector.broadcast %30 : vector<2x1xf32> to vector<2x16xf32>
    %32 = arith.subf %28, %31 : vector<2x16xf32>
    %33 = math.exp %32 : vector<2x16xf32>
    %cst_22 = arith.constant dense<0.000000e+00> : vector<2xf32>
    %34 = vector.multi_reduction <add>, %33, %cst_22 [1] : vector<2x16xf32> to vector<2xf32>
    %35 = vector.shape_cast %34 : vector<2xf32> to vector<2x1xf32>
    %36 = tpu.reciprocal %35 : vector<2x1xf32> -> vector<2x1xf32>
    %37 = vector.broadcast %36 : vector<2x1xf32> to vector<2x16xf32>
    %38 = arith.mulf %33, %37 : vector<2x16xf32>
    %39 = vector.shape_cast %38 : vector<2x16xf32> to vector<2x16x1xf32>
    %40 = vector.broadcast %39 : vector<2x16x1xf32> to vector<2x16x8xf32>
    %41 = arith.mulf %40, %18 : vector<2x16x8xf32>
    %cst_23 = arith.constant dense<0.000000e+00> : vector<2x8xf32>
    %42 = vector.multi_reduction <add>, %41, %cst_23 [1] : vector<2x16x8xf32> to vector<2x8xf32>
    %c0_24 = arith.constant 0 : index
    %c0_25 = arith.constant 0 : index
    %43 = vector.load %arg10[%c0_24, %c0_25] : memref<2x8xf32, #tpu.memory_space<vmem>>, vector<2x8xf32>
    tpu.vector_store %arg10[%c0_24, %c0_25], %42 {strides = array<i32>} : memref<2x8xf32, #tpu.memory_space<vmem>>, vector<2x8xf32>,
    %c0_26 = arith.constant 0 : index
    %c0_27 = arith.constant 0 : index
    %44 = vector.load %arg11[%c0_26, %c0_27] : memref<2x16xf32, #tpu.memory_space<vmem>>, vector<2x16xf32>
    tpu.vector_store %arg11[%c0_26, %c0_27], %38 {strides = array<i32>} : memref<2x16xf32, #tpu.memory_space<vmem>>, vector<2x16xf32>,
    return
  }
  func.func @transform_0(%arg0: i32) -> (i32, i32) {
    %c0_i32 = arith.constant 0 : i32
    %c0_i32_0 = arith.constant 0 : i32
    return %arg0, %c0_i32 : i32, i32
  }
  func.func @transform_1(%arg0: i32) -> (i32, i32) {
    %c0_i32 = arith.constant 0 : i32
    %c0_i32_0 = arith.constant 0 : i32
    return %arg0, %c0_i32 : i32, i32
  }
  func.func @transform_2(%arg0: i32) -> (i32, i32) {
    %c0_i32 = arith.constant 0 : i32
    %c0_i32_0 = arith.constant 0 : i32
    return %arg0, %c0_i32 : i32, i32
  }
  func.func @transform_3(%arg0: i32) -> (i32, i32) {
    %c0_i32 = arith.constant 0 : i32
    %c0_i32_0 = arith.constant 0 : i32
    %c0_i32_1 = arith.constant 0 : i32
    return %c0_i32, %c0_i32_0 : i32, i32
  }
  func.func @transform_4(%arg0: i32) -> (i32, i32) {
    %c0_i32 = arith.constant 0 : i32
    %c0_i32_0 = arith.constant 0 : i32
    %c0_i32_1 = arith.constant 0 : i32
    return %c0_i32, %c0_i32_0 : i32, i32
  }
  func.func @transform_5(%arg0: i32) -> (i32, i32) {
    %c0_i32 = arith.constant 0 : i32
    %c0_i32_0 = arith.constant 0 : i32
    %c0_i32_1 = arith.constant 0 : i32
    return %c0_i32, %c0_i32_0 : i32, i32
  }
  func.func @transform_6(%arg0: i32) -> (i32, i32) {
    %c0_i32 = arith.constant 0 : i32
    %c0_i32_0 = arith.constant 0 : i32
    %c0_i32_1 = arith.constant 0 : i32
    return %c0_i32, %c0_i32_0 : i32, i32
  }
  func.func @transform_7(%arg0: i32) -> (i32, i32) {
    %c0_i32 = arith.constant 0 : i32
    %c0_i32_0 = arith.constant 0 : i32
    %c0_i32_1 = arith.constant 0 : i32
    return %c0_i32, %c0_i32_0 : i32, i32
  }
  func.func @transform_8(%arg0: i32) -> (i32, i32) {
    %c0_i32 = arith.constant 0 : i32
    %c0_i32_0 = arith.constant 0 : i32
    %c0_i32_1 = arith.constant 0 : i32
    return %c0_i32, %c0_i32_0 : i32, i32
  }
  func.func @transform_9(%arg0: i32) -> (i32, i32) {
    %c0_i32 = arith.constant 0 : i32
    %c0_i32_0 = arith.constant 0 : i32
    return %arg0, %c0_i32 : i32, i32
  }
  func.func @transform_10(%arg0: i32) -> (i32, i32) {
    %c0_i32 = arith.constant 0 : i32
    %c0_i32_0 = arith.constant 0 : i32
    return %arg0, %c0_i32 : i32, i32
  }
}

</mosaic_0001>

<llo_original>
// kernel: tpu_custom_call.1
$region0: #{tpu_custom_call.1}
  #allocation0 [shape = 'u32[]', space=smem, size = 0x4, offset = 0x4, fixed_abs, tag = 'smem constant byte address 0x4 - core index']
  #allocation1 [shape = 'u32[144,128]{1,0:T(1,128)}', space=vmem, size = 0x12000, scoped, tag = 'internal scratch']
  %s0 = inlined_call_operand.vmem [shape: f32[32,32], index: 0, kind: input, shape index: {}]
  %s1 = inlined_call_operand.vmem [shape: f32[2,24], index: 1, kind: input, shape index: {}]
  %s2 = inlined_call_operand.vmem [shape: s32[2,1], index: 2, kind: input, shape index: {}]
  %s3 = inlined_call_operand.hbm [shape: f32[32,32], index: 3, kind: input, shape index: {}]
  %s4 = inlined_call_operand.hbm [shape: f32[1,32], index: 4, kind: input, shape index: {}]
  %s5 = inlined_call_operand.vmem [shape: f32[24,32], index: 5, kind: input, shape index: {}]
  %s6 = inlined_call_operand.hbm [shape: f32[1,32], index: 6, kind: input, shape index: {}]
  %s7 = inlined_call_operand.vmem [shape: f32[32,8], index: 7, kind: input, shape index: {}]
  %s8 = inlined_call_operand.vmem [shape: f32[1,8], index: 8, kind: input, shape index: {}]
  %s9 = inlined_call_operand.hbm [shape: f32[2,8], index: 9, kind: output, shape index: {0}]
  %s10 = inlined_call_operand.hbm [shape: f32[2,16], index: 10, kind: output, shape index: {1}]
  %11 = xla_tuple %s9, %s10
  %s12 = sld [smem:[#allocation0]]
  $region66: #{tpu_custom_call.1} parent=0
    _
  %s14 = ssub.s32 1, %s12
  %s15 = scalar_select 0, %s14, %s12
  $region1: #{tpu_custom_call.1} parent=0
    #allocation2 [shape = 'u8[16384]{0}', space=vmem, size = 0x4000, scoped, tag = 'input window, operand 3, single buffered']
    #allocation3 [shape = 's32[1]{0}', space=sflag, size = 0x4, scoped, tag = 'scoped memory for tpu_custom_call.1']
    #allocation4 [shape = 's32[1]{0}', space=sflag, size = 0x4, scoped, tag = 'scoped memory for tpu_custom_call.1']
    #allocation5 [shape = 'u8[512]{0}', space=vmem, size = 0x400, scoped, tag = 'input window, operand 4, single buffered']
    #allocation6 [shape = 's32[1]{0}', space=sflag, size = 0x4, scoped, tag = 'scoped memory for tpu_custom_call.1']
    #allocation7 [shape = 'u8[512]{0}', space=vmem, size = 0x400, scoped, tag = 'input window, operand 6, single buffered']
    #allocation8 [shape = 'u8[1024]{0}', space=vmem, size = 0x400, scoped, tag = 'output window, operand 0, single buffered']
    #allocation9 [shape = 'u8[1024]{0}', space=vmem, size = 0x400, scoped, tag = 'output window, operand 1, single buffered']
    #allocation10 [shape = 's32[1]{0}', space=sflag, size = 0x4, scoped, tag = 'scoped memory for tpu_custom_call.1']
    %16 = vsyncpa [#allocation3], 0
    %17 = vsyncpa [#allocation6], 0
    %18 = vsyncpa [#allocation4], 0
    %19 = vsyncpa [#allocation10], 0
    // Predicated region
    $region2: #{tpu_custom_call.1} parent=1 // pred_check
      _
    $region3: #{tpu_custom_call.1} parent=1 // pred_check_branch
      %21 = sbr.rel (0) target = $region5
    $region4: #{tpu_custom_call.1} parent=1 // pred_region
      _
    $region5: #{tpu_custom_call.1} parent=1 // pred_fallthru
      _
    // Predicated region
    $region6: #{tpu_custom_call.1} parent=1 // pred_check
      _
    $region7: #{tpu_custom_call.1} parent=1 // pred_check_branch
      %23 = sbr.rel (0) target = $region9
    $region8: #{tpu_custom_call.1} parent=1 // pred_region
      _
    $region9: #{tpu_custom_call.1} parent=1 // pred_fallthru
      _
    // Predicated region
    $region10: #{tpu_custom_call.1} parent=1 // pred_check
      _
    $region11: #{tpu_custom_call.1} parent=1 // pred_check_branch
      %25 = sbr.rel (0) target = $region13
    $region12: #{tpu_custom_call.1} parent=1 // pred_region
      _
    $region13: #{tpu_custom_call.1} parent=1 // pred_fallthru
      _
    // Predicated region
    $region14: #{tpu_custom_call.1} parent=1 // pred_check
      _
    $region15: #{tpu_custom_call.1} parent=1 // pred_check_branch
      %27 = sbr.rel (0) target = $region17
    $region16: #{tpu_custom_call.1} parent=1 // pred_region
      %s29 = ssub.s32 512, 512
      %30 = vsyncadd [#allocation3], %s29
      %s31 = sshll.u32 [#allocation2], 4
      %s32 = int_to_ptr.vmem [resolvable:$true] %s31
      %37 = dma.hbm_to_vmem [thread:$0]  %s3, 512, %s32, [#allocation3], 128, 128, 8
    $region17: #{tpu_custom_call.1} parent=1 // pred_fallthru
      _
    // Predicated region
    $region18: #{tpu_custom_call.1} parent=1 // pred_check
      _
    $region19: #{tpu_custom_call.1} parent=1 // pred_check_branch
      %39 = sbr.rel (0) target = $region21
    $region20: #{tpu_custom_call.1} parent=1 // pred_region
      %s41 = ssub.s32 16, 16
      %42 = vsyncadd [#allocation6], %s41
      %s44 = sshll.u32 [#allocation5], 4
      %s45 = int_to_ptr.vmem [resolvable:$true] %s44
      %47 = dma.hbm_to_vmem [thread:$0]  %s4, 16, %s45, [#allocation6]
    $region21: #{tpu_custom_call.1} parent=1 // pred_fallthru
      _
    // Predicated region
    $region22: #{tpu_custom_call.1} parent=1 // pred_check
      _
    $region23: #{tpu_custom_call.1} parent=1 // pred_check_branch
      %49 = sbr.rel (0) target = $region25
    $region24: #{tpu_custom_call.1} parent=1 // pred_region
      _
    $region25: #{tpu_custom_call.1} parent=1 // pred_fallthru
      _
    // Predicated region
    $region26: #{tpu_custom_call.1} parent=1 // pred_check
      _
    $region27: #{tpu_custom_call.1} parent=1 // pred_check_branch
      %51 = sbr.rel (0) target = $region29
    $region28: #{tpu_custom_call.1} parent=1 // pred_region
      %s53 = ssub.s32 16, 16
      %54 = vsyncadd [#allocation6], %s53
      %s56 = sshll.u32 [#allocation7], 4
      %s57 = int_to_ptr.vmem [resolvable:$true] %s56
      %59 = dma.hbm_to_vmem [thread:$0]  %s6, 16, %s57, [#allocation6]
    $region29: #{tpu_custom_call.1} parent=1 // pred_fallthru
      _
    // Predicated region
    $region30: #{tpu_custom_call.1} parent=1 // pred_check
      _
    $region31: #{tpu_custom_call.1} parent=1 // pred_check_branch
      %61 = sbr.rel (0) target = $region33
    $region32: #{tpu_custom_call.1} parent=1 // pred_region
      _
    $region33: #{tpu_custom_call.1} parent=1 // pred_fallthru
      _
    // Predicated region
    $region34: #{tpu_custom_call.1} parent=1 // pred_check
      _
    $region35: #{tpu_custom_call.1} parent=1 // pred_check_branch
      %63 = sbr.rel (0) target = $region37
    $region36: #{tpu_custom_call.1} parent=1 // pred_region
      _
    $region37: #{tpu_custom_call.1} parent=1 // pred_fallthru
      _
    // Predicated region
    $region38: #{tpu_custom_call.1} parent=1 // pred_check
      _
    $region39: #{tpu_custom_call.1} parent=1 // pred_check_branch
      %65 = sbr.rel (0) target = $region41
    $region40: #{tpu_custom_call.1} parent=1 // pred_region
      %66 = dma.done [#allocation3], 512
    $region41: #{tpu_custom_call.1} parent=1 // pred_fallthru
      _
    // Predicated region
    $region42: #{tpu_custom_call.1} parent=1 // pred_check
      _
    $region43: #{tpu_custom_call.1} parent=1 // pred_check_branch
      %68 = sbr.rel (0) target = $region45
    $region44: #{tpu_custom_call.1} parent=1 // pred_region
      %69 = dma.done [#allocation6], 16
    $region45: #{tpu_custom_call.1} parent=1 // pred_fallthru
      _
    // Predicated region
    $region46: #{tpu_custom_call.1} parent=1 // pred_check
      _
    $region47: #{tpu_custom_call.1} parent=1 // pred_check_branch
      %71 = sbr.rel (0) target = $region49
    $region48: #{tpu_custom_call.1} parent=1 // pred_region
      %72 = dma.done [#allocation6], 16
    $region49: #{tpu_custom_call.1} parent=1 // pred_fallthru
      _
    %v73 = vld [vmem:[%s0] sm:$0xff]
    %v74 = vld [vmem:[%s0 + $0x8] sm:$0xff]
    %v75 = vld [vmem:[%s0 + $0x10] sm:$0xff]
    %v76 = vld [vmem:[%s0 + $0x18] sm:$0xff]
    %v77 = vld [vmem:[%s1] sm:$0x3]
    %v78 = vld [vmem:[#allocation2] sm:$0xff]
    %v79 = vld [vmem:[#allocation2 + $0x8] sm:$0xff]
    %v80 = vld [vmem:[#allocation2 + $0x10] sm:$0xff]
    %v81 = vld [vmem:[#allocation2 + $0x18] sm:$0xff]
    %v82 = vld [vmem:[#allocation5] sm:$0x1]
    %v84 = vlaneseq
    %v85 = vshrl.u32 %v84, 7
    %v86 = vsub.s32 0, %v85
    %v87 = vrot.slane %v82, %v86
    %vm89 = vcmask 261120
    %v91 = vsel %vm89, %v73, 0
    %v94 = vsel %vm89, %v74, 0
    %v97 = vsel %vm89, %v75, 0
    %v100 = vsel %vm89, %v76, 0
    %102 = vmatprep.subr.mxu0 0.0
    %103 = vmatpush1.msra.mxu0 %v78
    %104 = vmatprep.subr.mxu0 0.0
    %105 = vmatpush1.msra.mxu0 %v79
    %106 = vmatprep.subr.mxu0 0.0
    %107 = vmatpush1.msra.mxu0 %v80
    %108 = vmatprep.subr.mxu0 0.0
    %109 = vmatpush1.msra.mxu0 %v81
    %110 = vmatprep.subr.mxu0 0.0
    %111 = vmatpush1.msra.mxu0 0.0
    %112 = vmatprep.subr.mxu0 0.0
    %113 = vmatpush1.msra.mxu0 0.0
    %114 = vmatprep.subr.mxu0 0.0
    %115 = vmatpush1.msra.mxu0 0.0
    %116 = vmatprep.subr.mxu0 0.0
    %117 = vmatpush1.msra.mxu0 0.0
    %118 = vmatprep.subr.mxu0 0.0
    %119 = vmatpush1.msra.mxu0 0.0
    %120 = vmatprep.subr.mxu0 0.0
    %121 = vmatpush1.msra.mxu0 0.0
    %122 = vmatprep.subr.mxu0 0.0
    %123 = vmatpush1.msra.mxu0 0.0
    %124 = vmatprep.subr.mxu0 0.0
    %125 = vmatpush1.msra.mxu0 0.0
    %126 = vmatprep.subr.mxu0 0.0
    %127 = vmatpush1.msra.mxu0 0.0
    %128 = vmatprep.subr.mxu0 0.0
    %129 = vmatpush1.msra.mxu0 0.0
    %130 = vmatprep.subr.mxu0 0.0
    %131 = vmatpush1.msra.mxu0 0.0
    %132 = vmatprep.subr.mxu0 0.0
    %133 = vmatpush1.msra.mxu0 0.0
    %134 = vmatprep.subr.mxu0 0.0
    %135 = vmatpush1.msra.mxu0 0.0
    %136 = vmatprep.subr.mxu0 0.0
    %137 = vmatpush1.msra.mxu0 0.0
    %138 = vmatprep.subr.mxu0 0.0
    %139 = vmatpush1.msra.mxu0 0.0
    %140 = vmatprep.subr.mxu0 0.0
    %141 = vmatpush1.msra.mxu0 0.0
    %142 = vmatprep.subr.mxu0 0.0
    %143 = vmatpush1.msra.mxu0 0.0
    %144 = vmatprep.subr.mxu0 0.0
    %145 = vmatpush1.msra.mxu0 0.0
    %146 = vmatprep.subr.mxu0 0.0
    %147 = vmatpush1.msra.mxu0 0.0
    %148 = vmatprep.subr.mxu0 0.0
    %149 = vmatpush1.msra.mxu0 0.0
    %150 = vmatprep.subr.mxu0 0.0
    %151 = vmatpush1.msra.mxu0 0.0
    %152 = vmatprep.subr.mxu0 0.0
    %153 = vmatpush1.msra.mxu0 0.0
    %154 = vmatprep.subr.mxu0 0.0
    %155 = vmatpush1.msra.mxu0 0.0
    %156 = vmatprep.subr.mxu0 0.0
    %157 = vmatpush1.msra.mxu0 0.0
    %158 = vmatprep.subr.mxu0 0.0
    %159 = vmatpush1.msra.mxu0 0.0
    %160 = vmatprep.subr.mxu0 0.0
    %161 = vmatpush1.msra.mxu0 0.0
    %162 = vmatprep.subr.mxu0 0.0
    %163 = vmatpush1.msra.mxu0 0.0
    %164 = vmatprep.subr.mxu0 0.0
    %165 = vmatpush1.msra.mxu0 0.0
    %166 = vmatprep.mubr.f32.mxu0 0.0
    %167 = vmatmul.mubr.f32.gmra.mrb[0].mxu0 %v91
    %v168 = vpop.f32.mrb[0].mxu0
    %v169 = vadd.f32 %v87, %v168
    %v170 = vpop.f32.mrb[0].mxu0
    %171 = vmatprep.mubr.f32.mxu0 0.0
    %172 = vmatmul.mubr.f32.gmra.mrb[0].mxu0 %v94
    %v173 = vpop.f32.mrb[0].mxu0
    %v174 = vadd.f32 %v87, %v173
    %v175 = vpop.f32.mrb[0].mxu0
    %176 = vmatprep.mubr.f32.mxu0 0.0
    %177 = vmatmul.mubr.f32.gmra.mrb[0].mxu0 %v97
    %v178 = vpop.f32.mrb[0].mxu0
    %v179 = vadd.f32 %v87, %v178
    %v180 = vpop.f32.mrb[0].mxu0
    %181 = vmatprep.mubr.f32.mxu0 0.0
    %182 = vmatmul.mubr.f32.gmra.mrb[0].mxu0 %v100
    %v183 = vpop.f32.mrb[0].mxu0
    %v184 = vadd.f32 %v87, %v183
    %v185 = vpop.f32.mrb[0].mxu0
    %186 = vdwg.mxu0
    %v187 = vld [vmem:[%s7] sm:$0xff]
    %v188 = vld [vmem:[%s7 + $0x8] sm:$0xff]
    %v189 = vld [vmem:[%s7 + $0x10] sm:$0xff]
    %v190 = vld [vmem:[%s7 + $0x18] sm:$0xff]
    %v191 = vld [vmem:[%s8] sm:$0x1]
    %v193 = vlaneseq
    %v194 = vshrl.u32 %v193, 7
    %v195 = vsub.s32 0, %v194
    %v196 = vrot.slane %v191, %v195
    %198 = vmatprep.subr.mxu0 0.0
    %199 = vmatpush1.msra.mxu0 %v187
    %200 = vmatprep.subr.mxu0 0.0
    %201 = vmatpush1.msra.mxu0 %v188
    %202 = vmatprep.subr.mxu0 0.0
    %203 = vmatpush1.msra.mxu0 %v189
    %204 = vmatprep.subr.mxu0 0.0
    %205 = vmatpush1.msra.mxu0 %v190
    %206 = vmatprep.subr.mxu0 0.0
    %207 = vmatpush1.msra.mxu0 0.0
    %208 = vmatprep.subr.mxu0 0.0
    %209 = vmatpush1.msra.mxu0 0.0
    %210 = vmatprep.subr.mxu0 0.0
    %211 = vmatpush1.msra.mxu0 0.0
    %212 = vmatprep.subr.mxu0 0.0
    %213 = vmatpush1.msra.mxu0 0.0
    %214 = vmatprep.subr.mxu0 0.0
    %215 = vmatpush1.msra.mxu0 0.0
    %216 = vmatprep.subr.mxu0 0.0
    %217 = vmatpush1.msra.mxu0 0.0
    %218 = vmatprep.subr.mxu0 0.0
    %219 = vmatpush1.msra.mxu0 0.0
    %220 = vmatprep.subr.mxu0 0.0
    %221 = vmatpush1.msra.mxu0 0.0
    %222 = vmatprep.subr.mxu0 0.0
    %223 = vmatpush1.msra.mxu0 0.0
    %224 = vmatprep.subr.mxu0 0.0
    %225 = vmatpush1.msra.mxu0 0.0
    %226 = vmatprep.subr.mxu0 0.0
    %227 = vmatpush1.msra.mxu0 0.0
    %228 = vmatprep.subr.mxu0 0.0
    %229 = vmatpush1.msra.mxu0 0.0
    %230 = vmatprep.subr.mxu0 0.0
    %231 = vmatpush1.msra.mxu0 0.0
    %232 = vmatprep.subr.mxu0 0.0
    %233 = vmatpush1.msra.mxu0 0.0
    %234 = vmatprep.subr.mxu0 0.0
    %235 = vmatpush1.msra.mxu0 0.0
    %236 = vmatprep.subr.mxu0 0.0
    %237 = vmatpush1.msra.mxu0 0.0
    %238 = vmatprep.subr.mxu0 0.0
    %239 = vmatpush1.msra.mxu0 0.0
    %240 = vmatprep.subr.mxu0 0.0
    %241 = vmatpush1.msra.mxu0 0.0
    %242 = vmatprep.subr.mxu0 0.0
    %243 = vmatpush1.msra.mxu0 0.0
    %244 = vmatprep.subr.mxu0 0.0
    %245 = vmatpush1.msra.mxu0 0.0
    %246 = vmatprep.subr.mxu0 0.0
    %247 = vmatpush1.msra.mxu0 0.0
    %248 = vmatprep.subr.mxu0 0.0
    %249 = vmatpush1.msra.mxu0 0.0
    %250 = vmatprep.subr.mxu0 0.0
    %251 = vmatpush1.msra.mxu0 0.0
    %252 = vmatprep.subr.mxu0 0.0
    %253 = vmatpush1.msra.mxu0 0.0
    %254 = vmatprep.subr.mxu0 0.0
    %255 = vmatpush1.msra.mxu0 0.0
    %256 = vmatprep.subr.mxu0 0.0
    %257 = vmatpush1.msra.mxu0 0.0
    %258 = vmatprep.subr.mxu0 0.0
    %259 = vmatpush1.msra.mxu0 0.0
    %260 = vmatprep.subr.mxu0 0.0
    %261 = vmatpush1.msra.mxu0 0.0
    %262 = vmatprep.mubr.f32.mxu0 0.0
    %263 = vmatmul.mubr.f32.gmra.mrb[0].mxu0 %v91
    %v264 = vpop.f32.mrb[0].mxu0
    %v265 = vadd.f32 %v196, %v264
    %v266 = vpop.f32.mrb[0].mxu0
    %267 = vmatprep.mubr.f32.mxu0 0.0
    %268 = vmatmul.mubr.f32.gmra.mrb[0].mxu0 %v94
    %v269 = vpop.f32.mrb[0].mxu0
    %v270 = vadd.f32 %v196, %v269
    %v271 = vpop.f32.mrb[0].mxu0
    %272 = vmatprep.mubr.f32.mxu0 0.0
    %273 = vmatmul.mubr.f32.gmra.mrb[0].mxu0 %v97
    %v274 = vpop.f32.mrb[0].mxu0
    %v275 = vadd.f32 %v196, %v274
    %v276 = vpop.f32.mrb[0].mxu0
    %277 = vmatprep.mubr.f32.mxu0 0.0
    %278 = vmatmul.mubr.f32.gmra.mrb[0].mxu0 %v100
    %v279 = vpop.f32.mrb[0].mxu0
    %v280 = vadd.f32 %v196, %v279
    %v281 = vpop.f32.mrb[0].mxu0
    %282 = vdwg.mxu0
    %v283 = vld [vmem:[%s5] sm:$0xff]
    %v284 = vld [vmem:[%s5 + $0x8] sm:$0xff]
    %v285 = vld [vmem:[%s5 + $0x10] sm:$0xff]
    %v286 = vld [vmem:[#allocation7] sm:$0x1]
    %v288 = vlaneseq
    %v289 = vshrl.u32 %v288, 7
    %v290 = vsub.s32 0, %v289
    %v291 = vrot.slane %v286, %v290
    %vm293 = vcmask 195584
    %v295 = vsel %vm293, %v77, 0
    %297 = vmatprep.subr.mxu0 0.0
    %298 = vmatpush1.msra.mxu0 %v283
    %299 = vmatprep.subr.mxu0 0.0
    %300 = vmatpush1.msra.mxu0 %v284
    %301 = vmatprep.subr.mxu0 0.0
    %302 = vmatpush1.msra.mxu0 %v285
    %303 = vmatprep.subr.mxu0 0.0
    %304 = vmatpush1.msra.mxu0 0.0
    %305 = vmatprep.subr.mxu0 0.0
    %306 = vmatpush1.msra.mxu0 0.0
    %307 = vmatprep.subr.mxu0 0.0
    %308 = vmatpush1.msra.mxu0 0.0
    %309 = vmatprep.subr.mxu0 0.0
    %310 = vmatpush1.msra.mxu0 0.0
    %311 = vmatprep.subr.mxu0 0.0
    %312 = vmatpush1.msra.mxu0 0.0
    %313 = vmatprep.subr.mxu0 0.0
    %314 = vmatpush1.msra.mxu0 0.0
    %315 = vmatprep.subr.mxu0 0.0
    %316 = vmatpush1.msra.mxu0 0.0
    %317 = vmatprep.subr.mxu0 0.0
    %318 = vmatpush1.msra.mxu0 0.0
    %319 = vmatprep.subr.mxu0 0.0
    %320 = vmatpush1.msra.mxu0 0.0
    %321 = vmatprep.subr.mxu0 0.0
    %322 = vmatpush1.msra.mxu0 0.0
    %323 = vmatprep.subr.mxu0 0.0
    %324 = vmatpush1.msra.mxu0 0.0
    %325 = vmatprep.subr.mxu0 0.0
    %326 = vmatpush1.msra.mxu0 0.0
    %327 = vmatprep.subr.mxu0 0.0
    %328 = vmatpush1.msra.mxu0 0.0
    %329 = vmatprep.subr.mxu0 0.0
    %330 = vmatpush1.msra.mxu0 0.0
    %331 = vmatprep.subr.mxu0 0.0
    %332 = vmatpush1.msra.mxu0 0.0
    %333 = vmatprep.subr.mxu0 0.0
    %334 = vmatpush1.msra.mxu0 0.0
    %335 = vmatprep.subr.mxu0 0.0
    %336 = vmatpush1.msra.mxu0 0.0
    %337 = vmatprep.subr.mxu0 0.0
    %338 = vmatpush1.msra.mxu0 0.0
    %339 = vmatprep.subr.mxu0 0.0
    %340 = vmatpush1.msra.mxu0 0.0
    %341 = vmatprep.subr.mxu0 0.0
    %342 = vmatpush1.msra.mxu0 0.0
    %343 = vmatprep.subr.mxu0 0.0
    %344 = vmatpush1.msra.mxu0 0.0
    %345 = vmatprep.subr.mxu0 0.0
    %346 = vmatpush1.msra.mxu0 0.0
    %347 = vmatprep.subr.mxu0 0.0
    %348 = vmatpush1.msra.mxu0 0.0
    %349 = vmatprep.subr.mxu0 0.0
    %350 = vmatpush1.msra.mxu0 0.0
    %351 = vmatprep.subr.mxu0 0.0
    %352 = vmatpush1.msra.mxu0 0.0
    %353 = vmatprep.subr.mxu0 0.0
    %354 = vmatpush1.msra.mxu0 0.0
    %355 = vmatprep.subr.mxu0 0.0
    %356 = vmatpush1.msra.mxu0 0.0
    %357 = vmatprep.subr.mxu0 0.0
    %358 = vmatpush1.msra.mxu0 0.0
    %359 = vmatprep.subr.mxu0 0.0
    %360 = vmatpush1.msra.mxu0 0.0
    %361 = vmatprep.mubr.f32.mxu0 0.0
    %362 = vmatmul.mubr.f32.gmra.mrb[0].mxu0 %v295
    %v363 = vpop.f32.mrb[0].mxu0
    %v364 = vadd.f32 %v291, %v363
    %v365 = vpop.f32.mrb[0].mxu0
    %366 = vdwg.mxu0
    %v369 = vunpack.c.l.s4 1966171168
    %v370 = vunpack.c.0.s8 %v369
    %v371 = vlaneseq
    %v372 = vshrl.u32 %v371, 7
    %v373 = vsub.s32 %v370, %v372
    %v374 = vrot.slane %v364, %v373
    %v375 = vcombine.high %v374, %v374
    %v377 = vunpack.c.l.s4 1966171168
    %v378 = vunpack.c.0.s8 %v377
    %v379 = vlaneseq
    %v380 = vshrl.u32 %v379, 7
    %v381 = vsub.s32 %v378, %v380
    %v382 = vrot.slane %v374, %v381
    %v384 = vunpack.c.l.s4 1966171168
    %v385 = vunpack.c.0.s8 %v384
    %v386 = vlaneseq
    %v387 = vshrl.u32 %v386, 7
    %v388 = vsub.s32 %v385, %v387
    %v389 = vrot.slane %v375, %v388
    %v390 = vlaneseq
    %v391 = vshrl.u32 %v390, 7
    %v392 = vsub.s32 0, %v391
    %v393 = vrot.slane %v382, %v392
    %v394 = vlaneseq
    %v395 = vshrl.u32 %v394, 7
    %v396 = vsub.s32 0, %v395
    %v397 = vrot.slane %v389, %v396
    %v400 = vmul.f32 %v169, %v393
    %v401 = vmul.f32 %v174, %v393
    %v402 = vmul.f32 %v179, %v397
    %v403 = vmul.f32 %v184, %v397
    %v404 = vsel %vm89, %v400, 0.0
    %405 = vadd.xlane.f32.xlu0 %v404
    %v406 = vpop.xlane.xlu0 %405
    %v407 = vsel %vm89, %v401, 0.0
    %408 = vadd.xlane.f32.xlu0 %v407
    %v409 = vpop.xlane.xlu0 %408
    %v410 = vsel %vm89, %v402, 0.0
    %411 = vadd.xlane.f32.xlu0 %v410
    %v412 = vpop.xlane.xlu0 %411
    %v413 = vsel %vm89, %v403, 0.0
    %414 = vadd.xlane.f32.xlu0 %v413
    %v415 = vpop.xlane.xlu0 %414
    %v416 = vlaneseq
    %v417 = vand.u32 %v416, 127
    %v418 = vld [vmem:[%s2] sm:$0x3]
    %419 = vset.pattern.permute.xlu0 0
    %420 = vperm.xlu0 %419, %v418
    %v421 = vpop.permute.xlu0 %420
    %vm422 = vcmp.lt.s32.totalorder %v417, %v421
    %v427 = vlaneseq
    %v428 = vshrl.u32 %v427, 7
    %v429 = vsub.s32 %v417, %v428
    %v430 = vrot.slane %v406, %v429
    %v431 = vadd.s32 %v417, 4294967288
    %v432 = vlaneseq
    %v433 = vshrl.u32 %v432, 7
    %v434 = vsub.s32 %v431, %v433
    %v435 = vrot.slane %v409, %v434
    %vm436 = vcmask 130112
    %v437 = vsel %vm436, %v435, %v430
    %v438 = vlaneseq
    %v439 = vshrl.u32 %v438, 7
    %v440 = vsub.s32 %v417, %v439
    %v441 = vrot.slane %v412, %v440
    %v442 = vlaneseq
    %v443 = vshrl.u32 %v442, 7
    %v444 = vsub.s32 %v431, %v443
    %v445 = vrot.slane %v415, %v444
    %v446 = vsel %vm436, %v445, %v441
    %vm447 = vcmask 1041409
    %v448 = vsel %vm447, %v446, %v437
    %v450 = vsel %vm422, %v448, -inf
    %vm451 = vcmask 123904
    %v452 = vsel %vm451, %v450, -inf
    %453 = vmax.xlane.f32.xlu0 %v452
    %v454 = vpop.xlane.xlu0 %453
    %v455 = vsub.f32 %v450, %v454
    %v456 = vmul.f32 %v455, 1.442695
    %v457 = vpow.pop %v456
    %v458 = vsel %vm451, %v457, 0.0
    %459 = vadd.xlane.f32.xlu0 %v458
    %v460 = vpop.xlane.xlu0 %459
    %v461 = vrcp.pop %v460
    %v462 = vmul.f32 %v457, %v461
    %v463 = vlaneseq
    %v464 = vshrl.u32 %v463, 7
    %v465 = vsub.s32 0, %v464
    %v466 = vrot.slane %v462, %v465
    %468 = vbcast.lane.b32.xlu0 %v466, 256
    %v469 = vpop.permute.xlu0 %468
    %s471 = sor.u32 256, 8
    %472 = vbcast.lane.b32.xlu0 %v466, %s471
    %v473 = vpop.permute.xlu0 %472
    %v474 = vlaneseq
    %v475 = vshrl.u32 %v474, 7
    %v476 = vsub.s32 1, %v475
    %v477 = vrot.slane %v462, %v476
    %479 = vbcast.lane.b32.xlu0 %v477, 256
    %v480 = vpop.permute.xlu0 %479
    %s482 = sor.u32 256, 8
    %483 = vbcast.lane.b32.xlu0 %v477, %s482
    %v484 = vpop.permute.xlu0 %483
    %v485 = vmul.f32 %v469, %v265
    %v486 = vmul.f32 %v473, %v270
    %v487 = vmul.f32 %v480, %v275
    %v488 = vmul.f32 %v484, %v280
    %vm489 = vcmask 64512
    %v490 = vsel %vm489, %v485, 0.0
    %v491 = vsel %vm489, %v486, 0.0
    %v492 = vadd.f32 %v490, %v491
    %v493 = vrot.slane %v492, 4
    %v494 = vadd.f32 %v492, %v493
    %v495 = vrot.slane %v494, 2
    %v496 = vadd.f32 %v494, %v495
    %v497 = vrot.slane %v496, 1
    %v498 = vadd.f32 %v496, %v497
    %v499 = vsel %vm489, %v487, 0.0
    %v500 = vsel %vm489, %v488, 0.0
    %v501 = vadd.f32 %v499, %v500
    %v502 = vrot.slane %v501, 4
    %v503 = vadd.f32 %v501, %v502
    %v504 = vrot.slane %v503, 2
    %v505 = vadd.f32 %v503, %v504
    %v506 = vrot.slane %v505, 1
    %v507 = vadd.f32 %v505, %v506
    %v510 = vsel %vm447, %v507, %v498
    %vm512 = vcmask 58368
    %513 = vst.msk [vmem:[#allocation8] sm:$0x3] %vm512, %v510
    %514 = vst.msk [vmem:[#allocation9] sm:$0x3] %vm451, %v462
    // Predicated region
    $region50: #{tpu_custom_call.1} parent=1 // pred_check
      _
    $region51: #{tpu_custom_call.1} parent=1 // pred_check_branch
      %516 = sbr.rel (0) target = $region53
    $region52: #{tpu_custom_call.1} parent=1 // pred_region
      %s518 = ssub.s32 32, 32
      %519 = vsyncadd [#allocation4], %s518
      %s521 = sshll.u32 [#allocation8], 4
      %s522 = int_to_ptr.vmem [resolvable:$true] %s521
      %524 = dma.vmem_to_hbm [thread:$0]  %s522, 32, %s9, [#allocation4]
    $region53: #{tpu_custom_call.1} parent=1 // pred_fallthru
      _
    // Predicated region
    $region54: #{tpu_custom_call.1} parent=1 // pred_check
      _
    $region55: #{tpu_custom_call.1} parent=1 // pred_check_branch
      %526 = sbr.rel (0) target = $region57
    $region56: #{tpu_custom_call.1} parent=1 // pred_region
      %s528 = ssub.s32 32, 32
      %529 = vsyncadd [#allocation10], %s528
      %s531 = sshll.u32 [#allocation9], 4
      %s532 = int_to_ptr.vmem [resolvable:$true] %s531
      %534 = dma.vmem_to_hbm [thread:$0]  %s532, 32, %s10, [#allocation10]
    $region57: #{tpu_custom_call.1} parent=1 // pred_fallthru
      _
    // Predicated region
    $region58: #{tpu_custom_call.1} parent=1 // pred_check
      _
    $region59: #{tpu_custom_call.1} parent=1 // pred_check_branch
      %536 = sbr.rel (0) target = $region61
    $region60: #{tpu_custom_call.1} parent=1 // pred_region
      %537 = dma.done [#allocation4], 32
    $region61: #{tpu_custom_call.1} parent=1 // pred_fallthru
      _
    // Predicated region
    $region62: #{tpu_custom_call.1} parent=1 // pred_check
      _
    $region63: #{tpu_custom_call.1} parent=1 // pred_check_branch
      %539 = sbr.rel (0) target = $region65
    $region64: #{tpu_custom_call.1} parent=1 // pred_region
      %540 = dma.done [#allocation10], 32
    $region65: #{tpu_custom_call.1} parent=1 // pred_fallthru
      _
    %541 = vsyncpa [#allocation3], 1
    %542 = vsyncpa [#allocation6], 1
    %543 = vsyncpa [#allocation4], 1
    %544 = vsyncpa [#allocation10], 1

</llo_original>
